<compile_context>
chip_gen: v7x
topology: tpu7x:2x2x1
jax: 0.10.0
libtpu: 0.0.40
codegen_flags: <defaults>
</compile_context>

<pallas_src>
import functools

import jax
import jax.numpy as jnp
from jax.experimental import pallas as pl
from jax.experimental.pallas import tpu as pltpu


def _round_up(x, m):
    return ((x + m - 1) // m) * m


def _select_tanh_dtype(compute_dtype):
    """bf16 tanh only when matmuls are already bf16 AND the chip has a bf16 EUP."""
    if jnp.dtype(compute_dtype) != jnp.dtype(jnp.bfloat16):
        return jnp.float32
    try:
        kind = jax.devices()[0].device_kind.lower()
    except Exception:  # pragma: no cover - defensive; keep a safe default
        return jnp.float32
    # v6e / v7x have a bf16 VPU+EUP path; v5e and older do not.
    if any(tag in kind for tag in ("v6", "v7", "7x")):
        return jnp.bfloat16
    return jnp.float32


def _critic_kernel(num_hidden, compute_dtype, tanh_dtype, *refs):
    """One batch tile of the whole MLP, computed feature-major.

    refs layout:
      obs_ref,                                           # (TB, obs_dim)
      wT_0, b_0, ..., wT_{nh-1}, b_{nh-1},               # hidden: (out,in), (out,1)
      w_last, b_last,                                    # (1, h_last), (1, 1)
      out_ref                                            # (1, TB) lane-dense
    """
    obs_ref = refs[0]
    out_ref = refs[-1]
    b_last_ref = refs[-2]          # (1, 1)       f32
    w_last_ref = refs[-3]          # (1, h_last)  compute_dtype
    hidden_refs = refs[1:-3]

    x = obs_ref[...].astype(compute_dtype)                 # (TB, obs_dim) batch-major
    h_t = None                                             # feature-major (feat, TB)

    for j in range(num_hidden):
        w = hidden_refs[2 * j][...]                        # (out, in) compute_dtype
        b = hidden_refs[2 * j + 1][...]                    # (out, 1)  f32
        if h_t is None:
            # Fold the batch-major -> feature-major transpose into this dot:
            # contract the feature axis of BOTH operands -> (out, TB).
            y = jax.lax.dot_general(
                w, x, (((1,), (1,)), ((), ())),
                preferred_element_type=jnp.float32)
        else:
            y = jax.lax.dot_general(
                w, h_t, (((1,), (0,)), ((), ())),
                preferred_element_type=jnp.float32)
        y = y + b                                          # lane-broadcast bias, f32
        # tanh on full 128-lane vregs (TB on lanes); bf16 EUP on v6e/v7x.
        h_t = jnp.tanh(y.astype(tanh_dtype)).astype(compute_dtype)

    # Final Linear(h_last, 1): (1, h_last) @ (h_last, TB) -> (1, TB), lane-dense.
    if h_t is None:
        val = jax.lax.dot_general(
            w_last_ref[...], x, (((1,), (1,)), ((), ())),
            preferred_element_type=jnp.float32)
    else:
        val = jax.lax.dot_general(
            w_last_ref[...], h_t, (((1,), (0,)), ((), ())),
            preferred_element_type=jnp.float32)
    out_ref[...] = (val + b_last_ref[...]).astype(out_ref.dtype)


def custom_critic_forward(obs, weights, biases, *, block_rows=4096,
                          compute_dtype=jnp.bfloat16, vmem_limit_bytes=None):
    """Pallas-backed critic forward.

    weights[j] stored as [in, out] (transpose of PyTorch's [out, in]).
    Returns float32 values with shape obs.shape[:-1].
    """
    assert len(weights) == len(biases) and len(weights) >= 1
    batch_shape = obs.shape[:-1]
    obs2d = obs.reshape(-1, obs.shape[-1])
    B, obs_dim = obs2d.shape
    num_hidden = len(weights) - 1
    tanh_dtype = _select_tanh_dtype(compute_dtype)

    # ---- Batch tiling: TB multiple of 128; even tile count when multi-tile
    # (keeps v7x's two TensorCores balanced on the "parallel" axis). ----------
    block_rows = max(_round_up(block_rows, 128), 128)
    B128 = _round_up(max(B, 1), 128)
    if B128 <= block_rows:
        TB, num_tiles = B128, 1
    else:
        num_tiles = -(-B128 // block_rows)
        if num_tiles % 2:
            num_tiles += 1
        TB = _round_up(-(-B128 // num_tiles), 128)
    B_pad = TB * num_tiles

    obs_in = obs2d if B_pad == B else jnp.pad(obs2d, ((0, B_pad - B), (0, 0)))

    operands = [obs_in]
    in_specs = [pl.BlockSpec((TB, obs_dim), lambda i: (i, 0))]

    # Hidden layers, pre-transposed to (out, in) for the feature-major kernel.
    # Weights in compute dtype (halves resident/HBM bytes for bf16); biases as
    # f32 (out, 1) columns so the bias add / tanh stay on the f32-or-bf16 VPU
    # path with TB on lanes.
    for j in range(num_hidden):
        w_t = weights[j].T.astype(compute_dtype)             # (out, in)
        b_c = biases[j].reshape(-1, 1).astype(jnp.float32)   # (out, 1)
        operands += [w_t, b_c]
        in_specs += [pl.BlockSpec(w_t.shape, lambda i: (0, 0)),
                     pl.BlockSpec(b_c.shape, lambda i: (0, 0))]

    w_last = weights[-1].reshape(1, -1).astype(compute_dtype)   # (1, h_last)
    b_last = biases[-1].reshape(1, 1).astype(jnp.float32)       # (1, 1)
    operands += [w_last, b_last]
    in_specs += [pl.BlockSpec(w_last.shape, lambda i: (0, 0)),
                 pl.BlockSpec(b_last.shape, lambda i: (0, 0))]

    out = pl.pallas_call(
        functools.partial(_critic_kernel, num_hidden, compute_dtype, tanh_dtype),
        grid=(num_tiles,),
        out_shape=jax.ShapeDtypeStruct((1, B_pad), jnp.float32),
        in_specs=in_specs,
        out_specs=pl.BlockSpec((1, TB), lambda i: (0, i)),
        compiler_params=pltpu.CompilerParams(
            dimension_semantics=("parallel",),      # v7x megacore; no-op on v5e/v6e
            vmem_limit_bytes=vmem_limit_bytes,      # raise if block_rows is bumped
        ),
    )(*operands)

    # torch.squeeze(..., -1) + restore original leading batch dims.
    # Always return f32 (the module's parameter dtype), not obs.dtype.
    return out.reshape(-1)[:B].reshape(batch_shape)


def _reference_forward(obs, weights, biases, compute_dtype=jnp.float32,
                       tanh_dtype=jnp.float32):
    """Pure-JAX reference, optionally with matching matmul/tanh casts."""
    h = obs.astype(jnp.float32)
    n = len(weights)
    for j in range(n):
        y = jnp.dot(h.astype(compute_dtype), weights[j].astype(compute_dtype),
                    preferred_element_type=jnp.float32)
        y = y + biases[j].astype(jnp.float32)
        h = jnp.tanh(y.astype(tanh_dtype)).astype(jnp.float32) if j < n - 1 else y
    return jnp.squeeze(h, -1)


def init_params(key, obs_dim, hidden_sizes):
    """Deterministic init mimicking nn.Linear default (uniform +-1/sqrt(fan_in))."""
    sizes = [obs_dim] + list(hidden_sizes) + [1]
    weights, biases = [], []
    for j in range(len(sizes) - 1):
        fan_in, fan_out = sizes[j], sizes[j + 1]
        key, kw, kb = jax.random.split(key, 3)
        bound = 1.0 / jnp.sqrt(jnp.float32(fan_in))
        # Stored as [in, out] (transpose of PyTorch's [out, in]).
        weights.append(
            jax.random.uniform(kw, (fan_in, fan_out), jnp.float32, -bound, bound)
        )
        biases.append(
            jax.random.uniform(kb, (fan_out,), jnp.float32, -bound, bound)
        )
    return weights, biases


if __name__ == "__main__":
    key = jax.random.PRNGKey(0)

    batch = 8
    obs_dim = 32
    hidden_sizes = (64, 64)      # tanh hidden activations, identity output

    key, k_obs, k_params = jax.random.split(key, 3)
    obs = jax.random.normal(k_obs, (batch, obs_dim), dtype=jnp.float32)
    weights, biases = init_params(k_params, obs_dim, hidden_sizes)

    # --- exact-f32 path ------------------------------------------------------
    v_f32 = jax.block_until_ready(
        custom_critic_forward(obs, weights, biases, compute_dtype=jnp.float32))
    assert v_f32.shape == (batch,)
    ref_f32 = _reference_forward(obs, weights, biases)
    assert jnp.allclose(v_f32, ref_f32, atol=1e-4, rtol=1e-4), (v_f32, ref_f32)

    # --- default bf16-matmul path --------------------------------------------
    v = jax.block_until_ready(custom_critic_forward(obs, weights, biases))
    assert v.shape == (batch,)
    tanh_dt = _select_tanh_dtype(jnp.bfloat16)
    ref_matched = _reference_forward(obs, weights, biases,
                                     compute_dtype=jnp.bfloat16, tanh_dtype=tanh_dt)
    assert jnp.allclose(v, ref_matched, atol=2e-2, rtol=2e-2), (v, ref_matched)
    assert jnp.allclose(v, ref_f32, atol=1.5e-1, rtol=1e-1), (v, ref_f32)

    # --- multi-tile path (even tile count, padded batch, extra leading dims) --
    key, k_obs2 = jax.random.split(key)
    obs2 = jax.random.normal(k_obs2, (3, 100, obs_dim), dtype=jnp.float32)
    v2 = jax.block_until_ready(
        custom_critic_forward(obs2, weights, biases, block_rows=128))
    assert v2.shape == (3, 100)
    ref2 = _reference_forward(obs2, weights, biases,
                              compute_dtype=jnp.bfloat16, tanh_dtype=tanh_dt)
    assert jnp.allclose(v2, ref2, atol=2e-2, rtol=2e-2), (v2, ref2)

    print("KERNEL_OK")
</pallas_src>

<mosaic_0001>
module attributes {stable_mosaic.version = 11 : i64} {
  func.func @_critic_kernel(%arg0: i32, %arg1: memref<128x32xf32, #tpu.memory_space<vmem>>, %arg2: memref<64x32xf32, #tpu.memory_space<vmem>>, %arg3: memref<64x1xf32, #tpu.memory_space<vmem>>, %arg4: memref<64x64xf32, #tpu.memory_space<vmem>>, %arg5: memref<64x1xf32, #tpu.memory_space<vmem>>, %arg6: memref<1x64xf32, #tpu.memory_space<vmem>>, %arg7: memref<1x1xf32, #tpu.memory_space<vmem>>, %arg8: memref<1x128xf32, #tpu.memory_space<vmem>>) attributes {dimension_semantics = [#tpu.dimension_semantics<parallel>], iteration_bounds = array<i64: 1>, scalar_prefetch = 0 : i64, scratch_operands = 0 : i64, tpu.core_type = #tpu.core_type<tc>, window_params = [{transform_indices = @transform_0, window_bounds = array<i64: 128, 32>}, {pipeline_mode = #tpu.pipeline_mode<synchronous>, transform_indices = @transform_1, window_bounds = array<i64: 64, 32>}, {pipeline_mode = #tpu.pipeline_mode<synchronous>, transform_indices = @transform_2, window_bounds = array<i64: 64, 1>}, {pipeline_mode = #tpu.pipeline_mode<synchronous>, transform_indices = @transform_3, window_bounds = array<i64: 64, 64>}, {pipeline_mode = #tpu.pipeline_mode<synchronous>, transform_indices = @transform_4, window_bounds = array<i64: 64, 1>}, {pipeline_mode = #tpu.pipeline_mode<synchronous>, transform_indices = @transform_5, window_bounds = array<i64: 1, 64>}, {pipeline_mode = #tpu.pipeline_mode<synchronous>, transform_indices = @transform_6, window_bounds = array<i64: 1, 1>}, {transform_indices = @transform_7, window_bounds = array<i64: 1, 128>}]} {
    %c0 = arith.constant 0 : index
    %c0_0 = arith.constant 0 : index
    %0 = vector.load %arg1[%c0, %c0_0] : memref<128x32xf32, #tpu.memory_space<vmem>>, vector<128x32xf32>
    %c0_1 = arith.constant 0 : index
    %c0_2 = arith.constant 0 : index
    %1 = vector.load %arg2[%c0_1, %c0_2] : memref<64x32xf32, #tpu.memory_space<vmem>>, vector<64x32xf32>
    %c0_3 = arith.constant 0 : index
    %c0_4 = arith.constant 0 : index
    %2 = vector.load %arg3[%c0_3, %c0_4] : memref<64x1xf32, #tpu.memory_space<vmem>>, vector<64x1xf32>
    %cst = arith.constant dense<0.000000e+00> : vector<64x128xf32>
    %3 = tpu.matmul %1, %0, %cst {dimension_numbers = #tpu.dot_dimension_numbers<[1], [1], [0], [0], [0, 0, 1, 0], [], []>} : vector<64x32xf32>, vector<128x32xf32>, vector<64x128xf32> -> vector<64x128xf32>
    %4 = vector.broadcast %2 : vector<64x1xf32> to vector<64x128xf32>
    %5 = arith.addf %3, %4 : vector<64x128xf32>
    %6 = math.tanh %5 : vector<64x128xf32>
    %c0_5 = arith.constant 0 : index
    %c0_6 = arith.constant 0 : index
    %7 = vector.load %arg4[%c0_5, %c0_6] : memref<64x64xf32, #tpu.memory_space<vmem>>, vector<64x64xf32>
    %c0_7 = arith.constant 0 : index
    %c0_8 = arith.constant 0 : index
    %8 = vector.load %arg5[%c0_7, %c0_8] : memref<64x1xf32, #tpu.memory_space<vmem>>, vector<64x1xf32>
    %cst_9 = arith.constant dense<0.000000e+00> : vector<64x128xf32>
    %9 = tpu.matmul %7, %6, %cst_9 {dimension_numbers = #tpu.dot_dimension_numbers<[1], [0], [0], [1], [0, 0, 1, 1], [], []>} : vector<64x64xf32>, vector<64x128xf32>, vector<64x128xf32> -> vector<64x128xf32>
    %10 = vector.broadcast %8 : vector<64x1xf32> to vector<64x128xf32>
    %11 = arith.addf %9, %10 : vector<64x128xf32>
    %12 = math.tanh %11 : vector<64x128xf32>
    %c0_10 = arith.constant 0 : index
    %c0_11 = arith.constant 0 : index
    %13 = vector.load %arg6[%c0_10, %c0_11] : memref<1x64xf32, #tpu.memory_space<vmem>>, vector<1x64xf32>
    %cst_12 = arith.constant dense<0.000000e+00> : vector<1x128xf32>
    %14 = tpu.matmul %13, %12, %cst_12 {dimension_numbers = #tpu.dot_dimension_numbers<[1], [0], [0], [1], [0, 0, 1, 1], [], []>} : vector<1x64xf32>, vector<64x128xf32>, vector<1x128xf32> -> vector<1x128xf32>
    %c0_13 = arith.constant 0 : index
    %c0_14 = arith.constant 0 : index
    %15 = vector.load %arg7[%c0_13, %c0_14] : memref<1x1xf32, #tpu.memory_space<vmem>>, vector<1x1xf32>
    %16 = vector.broadcast %15 : vector<1x1xf32> to vector<1x128xf32>
    %17 = arith.addf %14, %16 : vector<1x128xf32>
    %c0_15 = arith.constant 0 : index
    %c0_16 = arith.constant 0 : index
    %18 = vector.load %arg8[%c0_15, %c0_16] : memref<1x128xf32, #tpu.memory_space<vmem>>, vector<1x128xf32>
    tpu.vector_store %arg8[%c0_15, %c0_16], %17 {strides = array<i32>} : memref<1x128xf32, #tpu.memory_space<vmem>>, vector<1x128xf32>,
    return
  }
  func.func @transform_0(%arg0: i32) -> (i32, i32) {
    %c0_i32 = arith.constant 0 : i32
    %c0_i32_0 = arith.constant 0 : i32
    return %arg0, %c0_i32 : i32, i32
  }
  func.func @transform_1(%arg0: i32) -> (i32, i32) {
    %c0_i32 = arith.constant 0 : i32
    %c0_i32_0 = arith.constant 0 : i32
    %c0_i32_1 = arith.constant 0 : i32
    return %c0_i32, %c0_i32_0 : i32, i32
  }
  func.func @transform_2(%arg0: i32) -> (i32, i32) {
    %c0_i32 = arith.constant 0 : i32
    %c0_i32_0 = arith.constant 0 : i32
    %c0_i32_1 = arith.constant 0 : i32
    return %c0_i32, %c0_i32_0 : i32, i32
  }
  func.func @transform_3(%arg0: i32) -> (i32, i32) {
    %c0_i32 = arith.constant 0 : i32
    %c0_i32_0 = arith.constant 0 : i32
    %c0_i32_1 = arith.constant 0 : i32
    return %c0_i32, %c0_i32_0 : i32, i32
  }
  func.func @transform_4(%arg0: i32) -> (i32, i32) {
    %c0_i32 = arith.constant 0 : i32
    %c0_i32_0 = arith.constant 0 : i32
    %c0_i32_1 = arith.constant 0 : i32
    return %c0_i32, %c0_i32_0 : i32, i32
  }
  func.func @transform_5(%arg0: i32) -> (i32, i32) {
    %c0_i32 = arith.constant 0 : i32
    %c0_i32_0 = arith.constant 0 : i32
    %c0_i32_1 = arith.constant 0 : i32
    return %c0_i32, %c0_i32_0 : i32, i32
  }
  func.func @transform_6(%arg0: i32) -> (i32, i32) {
    %c0_i32 = arith.constant 0 : i32
    %c0_i32_0 = arith.constant 0 : i32
    %c0_i32_1 = arith.constant 0 : i32
    return %c0_i32, %c0_i32_0 : i32, i32
  }
  func.func @transform_7(%arg0: i32) -> (i32, i32) {
    %c0_i32 = arith.constant 0 : i32
    %c0_i32_0 = arith.constant 0 : i32
    return %c0_i32, %arg0 : i32, i32
  }
}

</mosaic_0001>

<llo_original>
// kernel: tpu_custom_call.1
$region0: #{tpu_custom_call.1}
  #allocation0 [shape = 'u32[]', space=smem, size = 0x4, offset = 0x4, fixed_abs, tag = 'smem constant byte address 0x4 - core index']
  #allocation1 [shape = 'u32[144,128]{1,0:T(1,128)}', space=vmem, size = 0x12000, scoped, tag = 'internal scratch']
  #allocation2 [shape = 'f32[1,1]{1,0:T(1,128)S(1)}', space=vmem, size = 0x200, scoped, tag = 'scoped memory for tpu_custom_call.1']
  %s0 = inlined_call_operand.vmem [shape: f32[128,32], index: 0, kind: input, shape index: {}]
  %s1 = inlined_call_operand.vmem [shape: f32[64,32], index: 1, kind: input, shape index: {}]
  %s2 = inlined_call_operand.vmem [shape: f32[64,1], index: 2, kind: input, shape index: {}]
  %s3 = inlined_call_operand.vmem [shape: f32[64,64], index: 3, kind: input, shape index: {}]
  %s4 = inlined_call_operand.vmem [shape: f32[64,1], index: 4, kind: input, shape index: {}]
  %s5 = inlined_call_operand.vmem [shape: f32[1,64], index: 5, kind: input, shape index: {}]
  %s6 = inlined_call_operand.<no memory space> [shape: f32[1,1], index: 6, kind: input, shape index: {}]
  %s7 = inlined_call_operand.hbm [shape: f32[1,128], index: 7, kind: output, shape index: {}]
  %s8 = sld [smem:[#allocation0]]
  $region38: #{tpu_custom_call.1} parent=0
    _
  %s10 = ssub.s32 1, %s8
  %s11 = scalar_select 0, %s10, %s8
  %v12 = vstv %s6
  %13 = vst [vmem:[#allocation2] sm:$0x1] %v12
  $region1: #{tpu_custom_call.1} parent=0
    #allocation3 [shape = 'u8[512]{0}', space=vmem, size = 0x400, scoped, tag = 'output window, operand 0, single buffered']
    #allocation4 [shape = 's32[1]{0}', space=sflag, size = 0x4, scoped, tag = 'scoped memory for tpu_custom_call.1']
    %14 = vsyncpa [#allocation4], 0
    // Predicated region
    $region2: #{tpu_custom_call.1} parent=1 // pred_check
      _
    $region3: #{tpu_custom_call.1} parent=1 // pred_check_branch
      %16 = sbr.rel (0) target = $region5
    $region4: #{tpu_custom_call.1} parent=1 // pred_region
      _
    $region5: #{tpu_custom_call.1} parent=1 // pred_fallthru
      _
    // Predicated region
    $region6: #{tpu_custom_call.1} parent=1 // pred_check
      _
    $region7: #{tpu_custom_call.1} parent=1 // pred_check_branch
      %18 = sbr.rel (0) target = $region9
    $region8: #{tpu_custom_call.1} parent=1 // pred_region
      _
    $region9: #{tpu_custom_call.1} parent=1 // pred_fallthru
      _
    // Predicated region
    $region10: #{tpu_custom_call.1} parent=1 // pred_check
      _
    $region11: #{tpu_custom_call.1} parent=1 // pred_check_branch
      %20 = sbr.rel (0) target = $region13
    $region12: #{tpu_custom_call.1} parent=1 // pred_region
      _
    $region13: #{tpu_custom_call.1} parent=1 // pred_fallthru
      _
    // Predicated region
    $region14: #{tpu_custom_call.1} parent=1 // pred_check
      _
    $region15: #{tpu_custom_call.1} parent=1 // pred_check_branch
      %22 = sbr.rel (0) target = $region17
    $region16: #{tpu_custom_call.1} parent=1 // pred_region
      _
    $region17: #{tpu_custom_call.1} parent=1 // pred_fallthru
      _
    // Predicated region
    $region18: #{tpu_custom_call.1} parent=1 // pred_check
      _
    $region19: #{tpu_custom_call.1} parent=1 // pred_check_branch
      %24 = sbr.rel (0) target = $region21
    $region20: #{tpu_custom_call.1} parent=1 // pred_region
      _
    $region21: #{tpu_custom_call.1} parent=1 // pred_fallthru
      _
    // Predicated region
    $region22: #{tpu_custom_call.1} parent=1 // pred_check
      _
    $region23: #{tpu_custom_call.1} parent=1 // pred_check_branch
      %26 = sbr.rel (0) target = $region25
    $region24: #{tpu_custom_call.1} parent=1 // pred_region
      _
    $region25: #{tpu_custom_call.1} parent=1 // pred_fallthru
      _
    // Predicated region
    $region26: #{tpu_custom_call.1} parent=1 // pred_check
      _
    $region27: #{tpu_custom_call.1} parent=1 // pred_check_branch
      %28 = sbr.rel (0) target = $region29
    $region28: #{tpu_custom_call.1} parent=1 // pred_region
      _
    $region29: #{tpu_custom_call.1} parent=1 // pred_fallthru
      _
    %v29 = vld [vmem:[%s0] sm:$0xff]
    %v30 = vld [vmem:[%s0 + $0x8] sm:$0xff]
    %v31 = vld [vmem:[%s0 + $0x10] sm:$0xff]
    %v32 = vld [vmem:[%s0 + $0x18] sm:$0xff]
    %v33 = vld [vmem:[%s0 + $0x20] sm:$0xff]
    %v34 = vld [vmem:[%s0 + $0x28] sm:$0xff]
    %v35 = vld [vmem:[%s0 + $0x30] sm:$0xff]
    %v36 = vld [vmem:[%s0 + $0x38] sm:$0xff]
    %v37 = vld [vmem:[%s0 + $0x40] sm:$0xff]
    %v38 = vld [vmem:[%s0 + $0x48] sm:$0xff]
    %v39 = vld [vmem:[%s0 + $0x50] sm:$0xff]
    %v40 = vld [vmem:[%s0 + $0x58] sm:$0xff]
    %v41 = vld [vmem:[%s0 + $0x60] sm:$0xff]
    %v42 = vld [vmem:[%s0 + $0x68] sm:$0xff]
    %v43 = vld [vmem:[%s0 + $0x70] sm:$0xff]
    %v44 = vld [vmem:[%s0 + $0x78] sm:$0xff]
    %v45 = vld [vmem:[%s1] sm:$0xff]
    %v46 = vld [vmem:[%s1 + $0x8] sm:$0xff]
    %v47 = vld [vmem:[%s1 + $0x10] sm:$0xff]
    %v48 = vld [vmem:[%s1 + $0x18] sm:$0xff]
    %v49 = vld [vmem:[%s1 + $0x20] sm:$0xff]
    %v50 = vld [vmem:[%s1 + $0x28] sm:$0xff]
    %v51 = vld [vmem:[%s1 + $0x30] sm:$0xff]
    %v52 = vld [vmem:[%s1 + $0x38] sm:$0xff]
    %v53 = vld [vmem:[%s2] sm:$0xff]
    %v54 = vld [vmem:[%s2 + $0x8] sm:$0xff]
    %v55 = vld [vmem:[%s2 + $0x10] sm:$0xff]
    %v56 = vld [vmem:[%s2 + $0x18] sm:$0xff]
    %v57 = vld [vmem:[%s2 + $0x20] sm:$0xff]
    %v58 = vld [vmem:[%s2 + $0x28] sm:$0xff]
    %v59 = vld [vmem:[%s2 + $0x30] sm:$0xff]
    %v60 = vld [vmem:[%s2 + $0x38] sm:$0xff]
    %62 = vset.pattern.permute.xlu0 0
    %63 = vperm.xlu0 %62, %v53
    %v64 = vpop.permute.xlu0 %63
    %67 = vset.pattern.permute.xlu0 0
    %68 = vperm.xlu0 %67, %v54
    %v69 = vpop.permute.xlu0 %68
    %72 = vset.pattern.permute.xlu0 0
    %73 = vperm.xlu0 %72, %v55
    %v74 = vpop.permute.xlu0 %73
    %77 = vset.pattern.permute.xlu0 0
    %78 = vperm.xlu0 %77, %v56
    %v79 = vpop.permute.xlu0 %78
    %82 = vset.pattern.permute.xlu0 0
    %83 = vperm.xlu0 %82, %v57
    %v84 = vpop.permute.xlu0 %83
    %87 = vset.pattern.permute.xlu0 0
    %88 = vperm.xlu0 %87, %v58
    %v89 = vpop.permute.xlu0 %88
    %92 = vset.pattern.permute.xlu0 0
    %93 = vperm.xlu0 %92, %v59
    %v94 = vpop.permute.xlu0 %93
    %97 = vset.pattern.permute.xlu0 0
    %98 = vperm.xlu0 %97, %v60
    %v99 = vpop.permute.xlu0 %98
    %vm101 = vcmask 261120
    %v103 = vsel %vm101, %v45, 0
    %v106 = vsel %vm101, %v46, 0
    %v109 = vsel %vm101, %v47, 0
    %v112 = vsel %vm101, %v48, 0
    %v115 = vsel %vm101, %v49, 0
    %v118 = vsel %vm101, %v50, 0
    %v121 = vsel %vm101, %v51, 0
    %v124 = vsel %vm101, %v52, 0
    %v127 = vsel %vm101, %v29, 0
    %v130 = vsel %vm101, %v30, 0
    %v133 = vsel %vm101, %v31, 0
    %v136 = vsel %vm101, %v32, 0
    %v139 = vsel %vm101, %v33, 0
    %v142 = vsel %vm101, %v34, 0
    %v145 = vsel %vm101, %v35, 0
    %v148 = vsel %vm101, %v36, 0
    %v151 = vsel %vm101, %v37, 0
    %v154 = vsel %vm101, %v38, 0
    %v157 = vsel %vm101, %v39, 0
    %v160 = vsel %vm101, %v40, 0
    %v163 = vsel %vm101, %v41, 0
    %v166 = vsel %vm101, %v42, 0
    %v169 = vsel %vm101, %v43, 0
    %v172 = vsel %vm101, %v44, 0
    %174 = vmatprep.subr.mxu0 0.0
    %175 = vmatpush1.xpose.msra.mxu0 %v127
    %176 = vmatprep.subr.mxu0 0.0
    %177 = vmatpush1.xpose.msra.mxu0 %v130
    %178 = vmatprep.subr.mxu0 0.0
    %179 = vmatpush1.xpose.msra.mxu0 %v133
    %180 = vmatprep.subr.mxu0 0.0
    %181 = vmatpush1.xpose.msra.mxu0 %v136
    %182 = vmatprep.subr.mxu0 0.0
    %183 = vmatpush1.xpose.msra.mxu0 %v139
    %184 = vmatprep.subr.mxu0 0.0
    %185 = vmatpush1.xpose.msra.mxu0 %v142
    %186 = vmatprep.subr.mxu0 0.0
    %187 = vmatpush1.xpose.msra.mxu0 %v145
    %188 = vmatprep.subr.mxu0 0.0
    %189 = vmatpush1.xpose.msra.mxu0 %v148
    %190 = vmatprep.subr.mxu0 0.0
    %191 = vmatpush1.xpose.msra.mxu0 %v151
    %192 = vmatprep.subr.mxu0 0.0
    %193 = vmatpush1.xpose.msra.mxu0 %v154
    %194 = vmatprep.subr.mxu0 0.0
    %195 = vmatpush1.xpose.msra.mxu0 %v157
    %196 = vmatprep.subr.mxu0 0.0
    %197 = vmatpush1.xpose.msra.mxu0 %v160
    %198 = vmatprep.subr.mxu0 0.0
    %199 = vmatpush1.xpose.msra.mxu0 %v163
    %200 = vmatprep.subr.mxu0 0.0
    %201 = vmatpush1.xpose.msra.mxu0 %v166
    %202 = vmatprep.subr.mxu0 0.0
    %203 = vmatpush1.xpose.msra.mxu0 %v169
    %204 = vmatprep.subr.mxu0 0.0
    %205 = vmatpush1.xpose.msra.mxu0 %v172
    %206 = vmatprep.subr.mxu0 0.0
    %207 = vmatpush1.xpose.msra.mxu0 0.0
    %208 = vmatprep.subr.mxu0 0.0
    %209 = vmatpush1.xpose.msra.mxu0 0.0
    %210 = vmatprep.subr.mxu0 0.0
    %211 = vmatpush1.xpose.msra.mxu0 0.0
    %212 = vmatprep.subr.mxu0 0.0
    %213 = vmatpush1.xpose.msra.mxu0 0.0
    %214 = vmatprep.subr.mxu0 0.0
    %215 = vmatpush1.xpose.msra.mxu0 0.0
    %216 = vmatprep.subr.mxu0 0.0
    %217 = vmatpush1.xpose.msra.mxu0 0.0
    %218 = vmatprep.subr.mxu0 0.0
    %219 = vmatpush1.xpose.msra.mxu0 0.0
    %220 = vmatprep.subr.mxu0 0.0
    %221 = vmatpush1.xpose.msra.mxu0 0.0
    %222 = vmatprep.subr.mxu0 0.0
    %223 = vmatpush1.xpose.msra.mxu0 0.0
    %224 = vmatprep.subr.mxu0 0.0
    %225 = vmatpush1.xpose.msra.mxu0 0.0
    %226 = vmatprep.subr.mxu0 0.0
    %227 = vmatpush1.xpose.msra.mxu0 0.0
    %228 = vmatprep.subr.mxu0 0.0
    %229 = vmatpush1.xpose.msra.mxu0 0.0
    %230 = vmatprep.subr.mxu0 0.0
    %231 = vmatpush1.xpose.msra.mxu0 0.0
    %232 = vmatprep.subr.mxu0 0.0
    %233 = vmatpush1.xpose.msra.mxu0 0.0
    %234 = vmatprep.subr.mxu0 0.0
    %235 = vmatpush1.xpose.msra.mxu0 0.0
    %236 = vmatprep.subr.mxu0 0.0
    %237 = vmatpush1.xpose.msra.mxu0 0.0
    %238 = vmatprep.mubr.f32.mxu0 0.0
    %239 = vmatmul.mubr.f32.gmra.mrb[0].mxu0 %v103
    %v240 = vpop.f32.mrb[0].mxu0
    %v241 = vadd.f32 %v64, %v240
    %v242 = vpop.f32.mrb[0].mxu0
    %243 = vmatprep.mubr.f32.mxu0 0.0
    %244 = vmatmul.mubr.f32.gmra.mrb[0].mxu0 %v106
    %v245 = vpop.f32.mrb[0].mxu0
    %v246 = vadd.f32 %v69, %v245
    %v247 = vpop.f32.mrb[0].mxu0
    %248 = vmatprep.mubr.f32.mxu0 0.0
    %249 = vmatmul.mubr.f32.gmra.mrb[0].mxu0 %v109
    %v250 = vpop.f32.mrb[0].mxu0
    %v251 = vadd.f32 %v74, %v250
    %v252 = vpop.f32.mrb[0].mxu0
    %253 = vmatprep.mubr.f32.mxu0 0.0
    %254 = vmatmul.mubr.f32.gmra.mrb[0].mxu0 %v112
    %v255 = vpop.f32.mrb[0].mxu0
    %v256 = vadd.f32 %v79, %v255
    %v257 = vpop.f32.mrb[0].mxu0
    %258 = vmatprep.mubr.f32.mxu0 0.0
    %259 = vmatmul.mubr.f32.gmra.mrb[0].mxu0 %v115
    %v260 = vpop.f32.mrb[0].mxu0
    %v261 = vadd.f32 %v84, %v260
    %v262 = vpop.f32.mrb[0].mxu0
    %263 = vmatprep.mubr.f32.mxu0 0.0
    %264 = vmatmul.mubr.f32.gmra.mrb[0].mxu0 %v118
    %v265 = vpop.f32.mrb[0].mxu0
    %v266 = vadd.f32 %v89, %v265
    %v267 = vpop.f32.mrb[0].mxu0
    %268 = vmatprep.mubr.f32.mxu0 0.0
    %269 = vmatmul.mubr.f32.gmra.mrb[0].mxu0 %v121
    %v270 = vpop.f32.mrb[0].mxu0
    %v271 = vadd.f32 %v94, %v270
    %v272 = vpop.f32.mrb[0].mxu0
    %273 = vmatprep.mubr.f32.mxu0 0.0
    %274 = vmatmul.mubr.f32.gmra.mrb[0].mxu0 %v124
    %v275 = vpop.f32.mrb[0].mxu0
    %v276 = vadd.f32 %v99, %v275
    %v277 = vpop.f32.mrb[0].mxu0
    %278 = vdwg.mxu0
    %v279 = vtanh.pop %v241
    %v280 = vtanh.pop %v246
    %v281 = vtanh.pop %v251
    %v282 = vtanh.pop %v256
    %v283 = vtanh.pop %v261
    %v284 = vtanh.pop %v266
    %v285 = vtanh.pop %v271
    %v286 = vtanh.pop %v276
    %v287 = vld [vmem:[%s3] sm:$0xff]
    %v288 = vld [vmem:[%s3 + $0x8] sm:$0xff]
    %v289 = vld [vmem:[%s3 + $0x10] sm:$0xff]
    %v290 = vld [vmem:[%s3 + $0x18] sm:$0xff]
    %v291 = vld [vmem:[%s3 + $0x20] sm:$0xff]
    %v292 = vld [vmem:[%s3 + $0x28] sm:$0xff]
    %v293 = vld [vmem:[%s3 + $0x30] sm:$0xff]
    %v294 = vld [vmem:[%s3 + $0x38] sm:$0xff]
    %v295 = vld [vmem:[%s4] sm:$0xff]
    %v296 = vld [vmem:[%s4 + $0x8] sm:$0xff]
    %v297 = vld [vmem:[%s4 + $0x10] sm:$0xff]
    %v298 = vld [vmem:[%s4 + $0x18] sm:$0xff]
    %v299 = vld [vmem:[%s4 + $0x20] sm:$0xff]
    %v300 = vld [vmem:[%s4 + $0x28] sm:$0xff]
    %v301 = vld [vmem:[%s4 + $0x30] sm:$0xff]
    %v302 = vld [vmem:[%s4 + $0x38] sm:$0xff]
    %304 = vset.pattern.permute.xlu0 0
    %305 = vperm.xlu0 %304, %v295
    %v306 = vpop.permute.xlu0 %305
    %309 = vset.pattern.permute.xlu0 0
    %310 = vperm.xlu0 %309, %v296
    %v311 = vpop.permute.xlu0 %310
    %314 = vset.pattern.permute.xlu0 0
    %315 = vperm.xlu0 %314, %v297
    %v316 = vpop.permute.xlu0 %315
    %319 = vset.pattern.permute.xlu0 0
    %320 = vperm.xlu0 %319, %v298
    %v321 = vpop.permute.xlu0 %320
    %324 = vset.pattern.permute.xlu0 0
    %325 = vperm.xlu0 %324, %v299
    %v326 = vpop.permute.xlu0 %325
    %329 = vset.pattern.permute.xlu0 0
    %330 = vperm.xlu0 %329, %v300
    %v331 = vpop.permute.xlu0 %330
    %334 = vset.pattern.permute.xlu0 0
    %335 = vperm.xlu0 %334, %v301
    %v336 = vpop.permute.xlu0 %335
    %339 = vset.pattern.permute.xlu0 0
    %340 = vperm.xlu0 %339, %v302
    %v341 = vpop.permute.xlu0 %340
    %vm343 = vcmask 523264
    %v345 = vsel %vm343, %v287, 0
    %v348 = vsel %vm343, %v288, 0
    %v351 = vsel %vm343, %v289, 0
    %v354 = vsel %vm343, %v290, 0
    %v357 = vsel %vm343, %v291, 0
    %v360 = vsel %vm343, %v292, 0
    %v363 = vsel %vm343, %v293, 0
    %v366 = vsel %vm343, %v294, 0
    %368 = vmatprep.subr.mxu0 0.0
    %369 = vmatpush1.msra.mxu0 %v279
    %370 = vmatprep.subr.mxu0 0.0
    %371 = vmatpush1.msra.mxu0 %v280
    %372 = vmatprep.subr.mxu0 0.0
    %373 = vmatpush1.msra.mxu0 %v281
    %374 = vmatprep.subr.mxu0 0.0
    %375 = vmatpush1.msra.mxu0 %v282
    %376 = vmatprep.subr.mxu0 0.0
    %377 = vmatpush1.msra.mxu0 %v283
    %378 = vmatprep.subr.mxu0 0.0
    %379 = vmatpush1.msra.mxu0 %v284
    %380 = vmatprep.subr.mxu0 0.0
    %381 = vmatpush1.msra.mxu0 %v285
    %382 = vmatprep.subr.mxu0 0.0
    %383 = vmatpush1.msra.mxu0 %v286
    %384 = vmatprep.subr.mxu0 0.0
    %385 = vmatpush1.msra.mxu0 0.0
    %386 = vmatprep.subr.mxu0 0.0
    %387 = vmatpush1.msra.mxu0 0.0
    %388 = vmatprep.subr.mxu0 0.0
    %389 = vmatpush1.msra.mxu0 0.0
    %390 = vmatprep.subr.mxu0 0.0
    %391 = vmatpush1.msra.mxu0 0.0
    %392 = vmatprep.subr.mxu0 0.0
    %393 = vmatpush1.msra.mxu0 0.0
    %394 = vmatprep.subr.mxu0 0.0
    %395 = vmatpush1.msra.mxu0 0.0
    %396 = vmatprep.subr.mxu0 0.0
    %397 = vmatpush1.msra.mxu0 0.0
    %398 = vmatprep.subr.mxu0 0.0
    %399 = vmatpush1.msra.mxu0 0.0
    %400 = vmatprep.subr.mxu0 0.0
    %401 = vmatpush1.msra.mxu0 0.0
    %402 = vmatprep.subr.mxu0 0.0
    %403 = vmatpush1.msra.mxu0 0.0
    %404 = vmatprep.subr.mxu0 0.0
    %405 = vmatpush1.msra.mxu0 0.0
    %406 = vmatprep.subr.mxu0 0.0
    %407 = vmatpush1.msra.mxu0 0.0
    %408 = vmatprep.subr.mxu0 0.0
    %409 = vmatpush1.msra.mxu0 0.0
    %410 = vmatprep.subr.mxu0 0.0
    %411 = vmatpush1.msra.mxu0 0.0
    %412 = vmatprep.subr.mxu0 0.0
    %413 = vmatpush1.msra.mxu0 0.0
    %414 = vmatprep.subr.mxu0 0.0
    %415 = vmatpush1.msra.mxu0 0.0
    %416 = vmatprep.subr.mxu0 0.0
    %417 = vmatpush1.msra.mxu0 0.0
    %418 = vmatprep.subr.mxu0 0.0
    %419 = vmatpush1.msra.mxu0 0.0
    %420 = vmatprep.subr.mxu0 0.0
    %421 = vmatpush1.msra.mxu0 0.0
    %422 = vmatprep.subr.mxu0 0.0
    %423 = vmatpush1.msra.mxu0 0.0
    %424 = vmatprep.subr.mxu0 0.0
    %425 = vmatpush1.msra.mxu0 0.0
    %426 = vmatprep.subr.mxu0 0.0
    %427 = vmatpush1.msra.mxu0 0.0
    %428 = vmatprep.subr.mxu0 0.0
    %429 = vmatpush1.msra.mxu0 0.0
    %430 = vmatprep.subr.mxu0 0.0
    %431 = vmatpush1.msra.mxu0 0.0
    %432 = vmatprep.mubr.f32.mxu0 0.0
    %433 = vmatmul.mubr.f32.gmra.mrb[0].mxu0 %v345
    %v434 = vpop.f32.mrb[0].mxu0
    %v435 = vadd.f32 %v306, %v434
    %v436 = vpop.f32.mrb[0].mxu0
    %437 = vmatprep.mubr.f32.mxu0 0.0
    %438 = vmatmul.mubr.f32.gmra.mrb[0].mxu0 %v348
    %v439 = vpop.f32.mrb[0].mxu0
    %v440 = vadd.f32 %v311, %v439
    %v441 = vpop.f32.mrb[0].mxu0
    %442 = vmatprep.mubr.f32.mxu0 0.0
    %443 = vmatmul.mubr.f32.gmra.mrb[0].mxu0 %v351
    %v444 = vpop.f32.mrb[0].mxu0
    %v445 = vadd.f32 %v316, %v444
    %v446 = vpop.f32.mrb[0].mxu0
    %447 = vmatprep.mubr.f32.mxu0 0.0
    %448 = vmatmul.mubr.f32.gmra.mrb[0].mxu0 %v354
    %v449 = vpop.f32.mrb[0].mxu0
    %v450 = vadd.f32 %v321, %v449
    %v451 = vpop.f32.mrb[0].mxu0
    %452 = vmatprep.mubr.f32.mxu0 0.0
    %453 = vmatmul.mubr.f32.gmra.mrb[0].mxu0 %v357
    %v454 = vpop.f32.mrb[0].mxu0
    %v455 = vadd.f32 %v326, %v454
    %v456 = vpop.f32.mrb[0].mxu0
    %457 = vmatprep.mubr.f32.mxu0 0.0
    %458 = vmatmul.mubr.f32.gmra.mrb[0].mxu0 %v360
    %v459 = vpop.f32.mrb[0].mxu0
    %v460 = vadd.f32 %v331, %v459
    %v461 = vpop.f32.mrb[0].mxu0
    %462 = vmatprep.mubr.f32.mxu0 0.0
    %463 = vmatmul.mubr.f32.gmra.mrb[0].mxu0 %v363
    %v464 = vpop.f32.mrb[0].mxu0
    %v465 = vadd.f32 %v336, %v464
    %v466 = vpop.f32.mrb[0].mxu0
    %467 = vmatprep.mubr.f32.mxu0 0.0
    %468 = vmatmul.mubr.f32.gmra.mrb[0].mxu0 %v366
    %v469 = vpop.f32.mrb[0].mxu0
    %v470 = vadd.f32 %v341, %v469
    %v471 = vpop.f32.mrb[0].mxu0
    %472 = vdwg.mxu0
    %v473 = vtanh.pop %v435
    %v474 = vtanh.pop %v440
    %v475 = vtanh.pop %v445
    %v476 = vtanh.pop %v450
    %v477 = vtanh.pop %v455
    %v478 = vtanh.pop %v460
    %v479 = vtanh.pop %v465
    %v480 = vtanh.pop %v470
    %v481 = vld [vmem:[%s5] sm:$0x1]
    %v482 = vld [vmem:[#allocation2] sm:$0x1]
    %484 = vset.pattern.permute.xlu0 0
    %485 = vperm.xlu0 %484, %v482
    %v486 = vpop.permute.xlu0 %485
    %v488 = vlaneseq
    %v489 = vshrl.u32 %v488, 7
    %v490 = vsub.s32 0, %v489
    %v491 = vrot.slane %v486, %v490
    %v493 = vsel %vm343, %v481, 0
    %495 = vmatprep.subr.mxu0 0.0
    %496 = vmatpush1.msra.mxu0 %v473
    %497 = vmatprep.subr.mxu0 0.0
    %498 = vmatpush1.msra.mxu0 %v474
    %499 = vmatprep.subr.mxu0 0.0
    %500 = vmatpush1.msra.mxu0 %v475
    %501 = vmatprep.subr.mxu0 0.0
    %502 = vmatpush1.msra.mxu0 %v476
    %503 = vmatprep.subr.mxu0 0.0
    %504 = vmatpush1.msra.mxu0 %v477
    %505 = vmatprep.subr.mxu0 0.0
    %506 = vmatpush1.msra.mxu0 %v478
    %507 = vmatprep.subr.mxu0 0.0
    %508 = vmatpush1.msra.mxu0 %v479
    %509 = vmatprep.subr.mxu0 0.0
    %510 = vmatpush1.msra.mxu0 %v480
    %511 = vmatprep.subr.mxu0 0.0
    %512 = vmatpush1.msra.mxu0 0.0
    %513 = vmatprep.subr.mxu0 0.0
    %514 = vmatpush1.msra.mxu0 0.0
    %515 = vmatprep.subr.mxu0 0.0
    %516 = vmatpush1.msra.mxu0 0.0
    %517 = vmatprep.subr.mxu0 0.0
    %518 = vmatpush1.msra.mxu0 0.0
    %519 = vmatprep.subr.mxu0 0.0
    %520 = vmatpush1.msra.mxu0 0.0
    %521 = vmatprep.subr.mxu0 0.0
    %522 = vmatpush1.msra.mxu0 0.0
    %523 = vmatprep.subr.mxu0 0.0
    %524 = vmatpush1.msra.mxu0 0.0
    %525 = vmatprep.subr.mxu0 0.0
    %526 = vmatpush1.msra.mxu0 0.0
    %527 = vmatprep.subr.mxu0 0.0
    %528 = vmatpush1.msra.mxu0 0.0
    %529 = vmatprep.subr.mxu0 0.0
    %530 = vmatpush1.msra.mxu0 0.0
    %531 = vmatprep.subr.mxu0 0.0
    %532 = vmatpush1.msra.mxu0 0.0
    %533 = vmatprep.subr.mxu0 0.0
    %534 = vmatpush1.msra.mxu0 0.0
    %535 = vmatprep.subr.mxu0 0.0
    %536 = vmatpush1.msra.mxu0 0.0
    %537 = vmatprep.subr.mxu0 0.0
    %538 = vmatpush1.msra.mxu0 0.0
    %539 = vmatprep.subr.mxu0 0.0
    %540 = vmatpush1.msra.mxu0 0.0
    %541 = vmatprep.subr.mxu0 0.0
    %542 = vmatpush1.msra.mxu0 0.0
    %543 = vmatprep.subr.mxu0 0.0
    %544 = vmatpush1.msra.mxu0 0.0
    %545 = vmatprep.subr.mxu0 0.0
    %546 = vmatpush1.msra.mxu0 0.0
    %547 = vmatprep.subr.mxu0 0.0
    %548 = vmatpush1.msra.mxu0 0.0
    %549 = vmatprep.subr.mxu0 0.0
    %550 = vmatpush1.msra.mxu0 0.0
    %551 = vmatprep.subr.mxu0 0.0
    %552 = vmatpush1.msra.mxu0 0.0
    %553 = vmatprep.subr.mxu0 0.0
    %554 = vmatpush1.msra.mxu0 0.0
    %555 = vmatprep.subr.mxu0 0.0
    %556 = vmatpush1.msra.mxu0 0.0
    %557 = vmatprep.subr.mxu0 0.0
    %558 = vmatpush1.msra.mxu0 0.0
    %559 = vmatprep.mubr.f32.mxu0 0.0
    %560 = vmatmul.mubr.f32.gmra.mrb[0].mxu0 %v493
    %v561 = vpop.f32.mrb[0].mxu0
    %v562 = vadd.f32 %v491, %v561
    %v563 = vpop.f32.mrb[0].mxu0
    %564 = vdwg.mxu0
    %565 = vst [vmem:[#allocation3] sm:$0x1] %v562
    // Predicated region
    $region30: #{tpu_custom_call.1} parent=1 // pred_check
      _
    $region31: #{tpu_custom_call.1} parent=1 // pred_check_branch
      %567 = sbr.rel (0) target = $region33
    $region32: #{tpu_custom_call.1} parent=1 // pred_region
      %s569 = ssub.s32 16, 16
      %570 = vsyncadd [#allocation4], %s569
      %s572 = sshll.u32 [#allocation3], 4
      %s573 = int_to_ptr.vmem [resolvable:$true] %s572
      %575 = dma.vmem_to_hbm [thread:$0]  %s573, 16, %s7, [#allocation4]
    $region33: #{tpu_custom_call.1} parent=1 // pred_fallthru
      _
    // Predicated region
    $region34: #{tpu_custom_call.1} parent=1 // pred_check
      _
    $region35: #{tpu_custom_call.1} parent=1 // pred_check_branch
      %577 = sbr.rel (0) target = $region37
    $region36: #{tpu_custom_call.1} parent=1 // pred_region
      %578 = dma.done [#allocation4], 16
    $region37: #{tpu_custom_call.1} parent=1 // pred_fallthru
      _
    %579 = vsyncpa [#allocation4], 1

</llo_original>
